<compile_context>
chip_gen: v7x
topology: tpu7x:2x2x1
jax: 0.10.0
libtpu: 0.0.40
codegen_flags: <defaults>
</compile_context>

<pallas_src>
import jax
import jax.numpy as jnp
from jax.experimental import pallas as pl
from jax.experimental.pallas import tpu as pltpu

_LANE = 128
_TARGET_BLOCK_BYTES = 6 * 1024 * 1024   # ~6 MiB per block (review: 6-8 MiB)
_MIN_BLOCK_BYTES = 1 * 1024 * 1024      # never shrink below ~1 MiB per block
_VMEM_LIMIT_BYTES = 48 * 1024 * 1024    # 4 x 6 MiB double-buffered in+out + headroom;
                                        # below v7x's 64 MiB physical VMEM.


def _round_up(a, b):
    return -(-a // b) * b


def _round_down(a, b):
    return (a // b) * b


def _mish_kernel(x_ref, o_ref):
    x = x_ref[...].astype(jnp.float32)
    # Rationalized mish: with e = exp(x),
    #   tanh(softplus(x)) = ((1+e)^2 - 1) / ((1+e)^2 + 1) = (e^2 + 2e) / (e^2 + 2e + 2)
    # -> one EUP transcendental (exp) + one EUP approx reciprocal instead of
    #    the exp + log1p + tanh chain. The min(x, 20) clamp keeps e^2 finite;
    #    for x > 20, tanh(softplus(x)) == 1 to f32 precision so x passes through.
    e = jnp.exp(jnp.minimum(x, 20.0))
    p = e * (e + 2.0)
    den = p + 2.0
    r = pl.reciprocal(den, approx=True)
    # One Newton-Raphson step (VPU-only, free in a mem-bound kernel) takes the
    # ~12-bit hardware seed to full f32 precision.
    r = r * (2.0 - den * r)
    y = jnp.where(x > 20.0, x, x * p * r)
    o_ref[...] = y.astype(o_ref.dtype)


def _pick_tile(total, unit_bytes, granule):
    """Tile length along the pipelined dimension.

    ~_TARGET_BLOCK_BYTES per block, a multiple of `granule` (or the full dim),
    preferring >= 4 grid steps (keeps both v7x TensorCores pipelined) without
    letting blocks fall below ~_MIN_BLOCK_BYTES.
    """
    if total <= granule:
        return total                       # full-dim block is always legal
    t = max(granule, _round_down(_TARGET_BLOCK_BYTES // unit_bytes, granule))
    if pl.cdiv(total, t) < 4:
        t_min = max(granule, _round_down(_MIN_BLOCK_BYTES // unit_bytes, granule))
        t = max(t_min, _round_up(pl.cdiv(total, 4), granule))
    return min(t, total)                   # == total -> single full-dim block


def mish(x: jax.Array) -> jax.Array:
    """Elementwise Mish. Accepts any shape; returns same shape/dtype."""
    orig_shape = x.shape
    dtype = x.dtype
    n = x.size
    if n == 0:
        return x

    itemsize = jnp.dtype(dtype).itemsize
    pack = max(1, 4 // itemsize)
    sub = 8 * pack                         # sublane granularity: 8 (f32), 16 (bf16)

    flat = x.reshape(-1)                   # free (no copy)

    cost = pl.CostEstimate(
        flops=10 * n, transcendentals=2 * n, bytes_accessed=2 * n * itemsize)
    cparams = pltpu.CompilerParams(
        dimension_semantics=("parallel",),
        vmem_limit_bytes=_VMEM_LIMIT_BYTES,
    )

    # --- Common path: some lane width (multiple of 128) divides n exactly. ---
    # Both reshapes are free, so HBM traffic is exactly the kernel's own 2n.
    W = 0
    for cand in (4096, 2048, 1024, 512, 256, 128):
        if n % cand == 0:
            W = cand
            break

    if W:
        rows = n // W
        tr = _pick_tile(rows, W * itemsize, sub)
        grid = (pl.cdiv(rows, tr),)        # ragged last row-block is masked
        out = pl.pallas_call(
            _mish_kernel,
            out_shape=jax.ShapeDtypeStruct((rows, W), dtype),
            grid_spec=pltpu.PrefetchScalarGridSpec(
                num_scalar_prefetch=0,
                grid=grid,
                in_specs=[pl.BlockSpec((tr, W), lambda i: (i, 0))],
                out_specs=pl.BlockSpec((tr, W), lambda i: (i, 0)),
            ),
            compiler_params=cparams,
            cost_estimate=cost,
        )(flat.reshape(rows, W))           # free (no copy)
        return out.reshape(orig_shape)

    # --- Ragged fallback: no pad / slice-back round-trip. ---
    # Run directly on the 1-D flat array with a cdiv grid; Pallas masks the
    # ragged last block (OOB reads unused, OOB writes dropped), so HBM traffic
    # stays at 2n bytes instead of the old ~6n pad+kernel+slice path.
    granule = sub * _LANE
    blk = _pick_tile(n, itemsize, granule)
    grid = (pl.cdiv(n, blk),)
    out = pl.pallas_call(
        _mish_kernel,
        out_shape=jax.ShapeDtypeStruct((n,), dtype),
        grid_spec=pltpu.PrefetchScalarGridSpec(
            num_scalar_prefetch=0,
            grid=grid,
            in_specs=[pl.BlockSpec((blk,), lambda i: (i,))],
            out_specs=pl.BlockSpec((blk,), lambda i: (i,)),
        ),
        compiler_params=cparams,
        cost_estimate=cost,
    )(flat)
    return out.reshape(orig_shape)


def _mish_ref(x):
    return x * jnp.tanh(jax.nn.softplus(x))


if __name__ == "__main__":
    key = jax.random.PRNGKey(0)
    k1, k2 = jax.random.split(key)

    # NCHW activation, aligned path (2*4*16*16 = 2048 elements, free reshapes).
    x = jax.random.normal(k1, (2, 4, 16, 16), dtype=jnp.float32)
    y = jax.block_until_ready(mish(x))
    y_ref = _mish_ref(x)
    assert y.shape == x.shape and y.dtype == x.dtype
    assert jnp.allclose(y, y_ref, atol=1e-5, rtol=1e-5), "aligned-path mismatch"

    # Ragged path (3*7*53 = 1113 elements, not a multiple of 128): 1-D kernel,
    # no pad, no slice-back.
    x2 = jax.random.normal(k2, (3, 7, 53), dtype=jnp.float32)
    y2 = jax.block_until_ready(mish(x2))
    assert y2.shape == x2.shape and y2.dtype == x2.dtype
    assert jnp.allclose(y2, _mish_ref(x2), atol=1e-5, rtol=1e-5), "ragged-path mismatch"

    print("KERNEL_OK")
</pallas_src>

<mosaic_0001>
module attributes {stable_mosaic.version = 11 : i64} {
  func.func @_mish_kernel(%arg0: i32, %arg1: memref<1x2048xf32, #tpu.memory_space<vmem>>, %arg2: memref<1x2048xf32, #tpu.memory_space<vmem>>) attributes {dimension_semantics = [#tpu.dimension_semantics<parallel>], iteration_bounds = array<i64: 1>, scalar_prefetch = 0 : i64, scratch_operands = 0 : i64, tpu.core_type = #tpu.core_type<tc>, window_params = [{transform_indices = @transform_0, window_bounds = array<i64: 1, 2048>}, {transform_indices = @transform_1, window_bounds = array<i64: 1, 2048>}]} {
    %c0 = arith.constant 0 : index
    %c0_0 = arith.constant 0 : index
    %0 = vector.load %arg1[%c0, %c0_0] : memref<1x2048xf32, #tpu.memory_space<vmem>>, vector<1x2048xf32>
    %cst = arith.constant 2.000000e+01 : f32
    %1 = vector.broadcast %cst : f32 to vector<1x2048xf32>
    %2 = arith.minimumf %0, %1 : vector<1x2048xf32>
    %3 = math.exp %2 : vector<1x2048xf32>
    %cst_1 = arith.constant 2.000000e+00 : f32
    %4 = vector.broadcast %cst_1 : f32 to vector<1x2048xf32>
    %5 = arith.addf %3, %4 : vector<1x2048xf32>
    %6 = arith.mulf %3, %5 : vector<1x2048xf32>
    %cst_2 = arith.constant 2.000000e+00 : f32
    %7 = vector.broadcast %cst_2 : f32 to vector<1x2048xf32>
    %8 = arith.addf %6, %7 : vector<1x2048xf32>
    %9 = tpu.reciprocal %8 {approx = true} : vector<1x2048xf32> -> vector<1x2048xf32>
    %10 = arith.mulf %8, %9 : vector<1x2048xf32>
    %cst_3 = arith.constant 2.000000e+00 : f32
    %11 = vector.broadcast %cst_3 : f32 to vector<1x2048xf32>
    %12 = arith.subf %11, %10 : vector<1x2048xf32>
    %13 = arith.mulf %9, %12 : vector<1x2048xf32>
    %cst_4 = arith.constant 2.000000e+01 : f32
    %14 = vector.broadcast %cst_4 : f32 to vector<1x2048xf32>
    %15 = arith.cmpf ogt, %0, %14 : vector<1x2048xf32>
    %16 = arith.mulf %0, %6 : vector<1x2048xf32>
    %17 = arith.mulf %16, %13 : vector<1x2048xf32>
    %18 = arith.select %15, %0, %17 : vector<1x2048xi1>, vector<1x2048xf32>
    %c0_5 = arith.constant 0 : index
    %c0_6 = arith.constant 0 : index
    %19 = vector.load %arg2[%c0_5, %c0_6] : memref<1x2048xf32, #tpu.memory_space<vmem>>, vector<1x2048xf32>
    tpu.vector_store %arg2[%c0_5, %c0_6], %18 {strides = array<i32>} : memref<1x2048xf32, #tpu.memory_space<vmem>>, vector<1x2048xf32>,
    return
  }
  func.func @transform_0(%arg0: i32) -> (i32, i32) {
    %c0_i32 = arith.constant 0 : i32
    %c0_i32_0 = arith.constant 0 : i32
    return %arg0, %c0_i32 : i32, i32
  }
  func.func @transform_1(%arg0: i32) -> (i32, i32) {
    %c0_i32 = arith.constant 0 : i32
    %c0_i32_0 = arith.constant 0 : i32
    return %arg0, %c0_i32 : i32, i32
  }
}

</mosaic_0001>

<llo_original>
// kernel: tpu_custom_call.1
$region0: #{tpu_custom_call.1}
  #allocation0 [shape = 'u32[]', space=smem, size = 0x4, offset = 0x4, fixed_abs, tag = 'smem constant byte address 0x4 - core index']
  #allocation1 [shape = 'u32[144,128]{1,0:T(1,128)}', space=vmem, size = 0x12000, scoped, tag = 'internal scratch']
  %s0 = inlined_call_operand.hbm [shape: f32[1,2048], index: 0, kind: input, shape index: {}]
  %s1 = inlined_call_operand.hbm [shape: f32[1,2048], index: 1, kind: output, shape index: {}]
  %s2 = sld [smem:[#allocation0]]
  $region18: #{tpu_custom_call.1} parent=0
    _
  %s4 = ssub.s32 1, %s2
  %s5 = scalar_select 0, %s4, %s2
  $region1: #{tpu_custom_call.1} parent=0
    #allocation2 [shape = 'u8[8192]{0}', space=vmem, size = 0x2000, scoped, tag = 'input window, operand 0, single buffered']
    #allocation3 [shape = 's32[1]{0}', space=sflag, size = 0x4, scoped, tag = 'scoped memory for tpu_custom_call.1']
    #allocation4 [shape = 's32[1]{0}', space=sflag, size = 0x4, scoped, tag = 'scoped memory for tpu_custom_call.1']
    #allocation5 [shape = 'u8[8192]{0}', space=vmem, size = 0x2000, scoped, tag = 'output window, operand 0, single buffered']
    %6 = vsyncpa [#allocation3], 0
    %7 = vsyncpa [#allocation4], 0
    // Predicated region
    $region2: #{tpu_custom_call.1} parent=1 // pred_check
      _
    $region3: #{tpu_custom_call.1} parent=1 // pred_check_branch
      %9 = sbr.rel (0) target = $region5
    $region4: #{tpu_custom_call.1} parent=1 // pred_region
      %s11 = ssub.s32 256, 256
      %12 = vsyncadd [#allocation3], %s11
      %s14 = sshll.u32 [#allocation2], 4
      %s15 = int_to_ptr.vmem [resolvable:$true] %s14
      %17 = dma.hbm_to_vmem [thread:$0]  %s0, 256, %s15, [#allocation3]
    $region5: #{tpu_custom_call.1} parent=1 // pred_fallthru
      _
    // Predicated region
    $region6: #{tpu_custom_call.1} parent=1 // pred_check
      _
    $region7: #{tpu_custom_call.1} parent=1 // pred_check_branch
      %19 = sbr.rel (0) target = $region9
    $region8: #{tpu_custom_call.1} parent=1 // pred_region
      %20 = dma.done [#allocation3], 256
    $region9: #{tpu_custom_call.1} parent=1 // pred_fallthru
      _
    %v21 = vld [vmem:[#allocation2] sm:$0xff]
    %v22 = vld [vmem:[#allocation2 + $0x8] sm:$0xff]
    %v23 = vmin.f32 %v21, 20.0
    %v24 = vmin.f32 %v22, 20.0
    %v25 = vmul.f32 %v23, 1.442695
    %v26 = vpow.pop %v25
    %v27 = vmul.f32 %v24, 1.442695
    %v28 = vpow.pop %v27
    %v29 = vadd.f32 %v26, 2.0
    %v30 = vadd.f32 %v28, 2.0
    %v31 = vmul.f32 %v26, %v29
    %v32 = vmul.f32 %v28, %v30
    %v33 = vadd.f32 %v31, 2.0
    %v34 = vadd.f32 %v32, 2.0
    %v35 = vrcp.pop %v33
    %v36 = vrcp.pop %v34
    %v37 = vmul.f32 %v33, %v35
    %v38 = vmul.f32 %v34, %v36
    %v39 = vsub.f32 2.0, %v37
    %v40 = vsub.f32 2.0, %v38
    %v41 = vmul.f32 %v35, %v39
    %v42 = vmul.f32 %v36, %v40
    %vm43 = vcmp.gt.f32.partialorder %v21, 20.0
    %vm44 = vcmp.gt.f32.partialorder %v22, 20.0
    %v45 = vmul.f32 %v21, %v31
    %v46 = vmul.f32 %v22, %v32
    %v47 = vmul.f32 %v45, %v41
    %v48 = vmul.f32 %v46, %v42
    %v49 = vsel %vm43, %v21, %v47
    %v50 = vsel %vm44, %v22, %v48
    %51 = vst [vmem:[#allocation5] sm:$0xff] %v49
    %52 = vst [vmem:[#allocation5 + $0x8] sm:$0xff] %v50
    // Predicated region
    $region10: #{tpu_custom_call.1} parent=1 // pred_check
      _
    $region11: #{tpu_custom_call.1} parent=1 // pred_check_branch
      %54 = sbr.rel (0) target = $region13
    $region12: #{tpu_custom_call.1} parent=1 // pred_region
      %s56 = ssub.s32 256, 256
      %57 = vsyncadd [#allocation4], %s56
      %s59 = sshll.u32 [#allocation5], 4
      %s60 = int_to_ptr.vmem [resolvable:$true] %s59
      %62 = dma.vmem_to_hbm [thread:$0]  %s60, 256, %s1, [#allocation4]
    $region13: #{tpu_custom_call.1} parent=1 // pred_fallthru
      _
    // Predicated region
    $region14: #{tpu_custom_call.1} parent=1 // pred_check
      _
    $region15: #{tpu_custom_call.1} parent=1 // pred_check_branch
      %64 = sbr.rel (0) target = $region17
    $region16: #{tpu_custom_call.1} parent=1 // pred_region
      %65 = dma.done [#allocation4], 256
    $region17: #{tpu_custom_call.1} parent=1 // pred_fallthru
      _
    %66 = vsyncpa [#allocation3], 1
    %67 = vsyncpa [#allocation4], 1

</llo_original>
